<compile_context>
chip_gen: v5e
topology: v5e:2x2
jax: 0.10.0
libtpu: 0.0.40
codegen_flags: <defaults>
</compile_context>

<pallas_src>
import jax
import jax.numpy as jnp
from jax import lax
from jax.experimental import pallas as pl
from jax.experimental.pallas import tpu as pltpu

TB = 256  # tokens per grid step (dense output block, MXU-friendly)


def embedding_kernel(ids_ref, table_ref, out_ref):
    # ids_ref:   VMEM [TB, 1]  int32   (token ids for this block, as a column)
    # table_ref: VMEM [V, D]           (full embedding table, resident)
    # out_ref:   VMEM [TB, D]          (one dense token-block of output)
    tb = out_ref.shape[0]
    v = table_ref.shape[0]

    ids = ids_ref[...]                                            # (TB, 1)
    vocab_iota = lax.broadcasted_iota(jnp.int32, (tb, v), 1)      # (TB, V)
    one_hot = (ids == vocab_iota).astype(table_ref.dtype)         # (TB, V)

    # One MXU matmul replaces TB dependent dynamic-slice loads + masked stores.
    out_ref[...] = jnp.dot(
        one_hot, table_ref[...], preferred_element_type=jnp.float32
    ).astype(out_ref.dtype)


def embedding_forward(input_ids, wte, tb=TB):
    """input_ids: [B, S] int -> [B, S, D] in wte.dtype (gather of wte rows)."""
    B, S = input_ids.shape
    V, D = wte.shape
    num_tokens = B * S

    num_blocks = pl.cdiv(num_tokens, tb)
    padded_tokens = num_blocks * tb

    ids_flat = input_ids.reshape(num_tokens).astype(jnp.int32)
    # Pad with token 0 so B*S need not divide TB; padded rows are sliced off.
    ids_flat = jnp.pad(ids_flat, (0, padded_tokens - num_tokens))
    ids_col = ids_flat.reshape(padded_tokens, 1)

    # Explicit VMEM budget: resident table + double-buffered ids/out blocks +
    # the in-kernel one-hot temporaries, plus headroom. Clamped so the request
    # stays sane on v7x's 64 MiB per-TC VMEM.
    itemsize = jnp.dtype(wte.dtype).itemsize
    table_bytes = V * D * itemsize
    out_bytes = 2 * tb * D * itemsize
    ids_bytes = 2 * tb * 128 * 4            # (TB, 1) int32 block, lane-padded
    onehot_bytes = 2 * tb * V * 4
    vmem_limit = min(
        table_bytes + out_bytes + ids_bytes + onehot_bytes + (8 << 20),
        48 * 1024 * 1024,
    )

    out_padded = pl.pallas_call(
        embedding_kernel,
        out_shape=jax.ShapeDtypeStruct((padded_tokens, D), wte.dtype),
        grid_spec=pltpu.PrefetchScalarGridSpec(
            num_scalar_prefetch=0,
            grid=(num_blocks,),
            in_specs=[
                pl.BlockSpec((tb, 1), lambda i: (i, 0)),   # token-id column
                pl.BlockSpec((V, D), lambda i: (0, 0)),    # full table, resident
            ],
            out_specs=pl.BlockSpec((tb, D), lambda i: (i, 0)),
        ),
        compiler_params=pltpu.CompilerParams(
            dimension_semantics=("parallel",),   # token blocks are independent
            vmem_limit_bytes=int(vmem_limit),
        ),
    )(ids_col, wte)

    return out_padded[:num_tokens].reshape(B, S, D)


if __name__ == "__main__":
    key = jax.random.PRNGKey(0)
    k_ids, k_wte = jax.random.split(key)

    B, S = 2, 8          # batch, sequence
    V, D = 512, 128      # vocab size, d_model (small synthetic sizes)

    input_ids = jax.random.randint(k_ids, (B, S), 0, V, dtype=jnp.int32)
    # Deterministic synthetic embedding table (stands in for transformer.wte).
    wte = jax.random.normal(k_wte, (V, D), dtype=jnp.float32)

    hidden_states = embedding_forward(input_ids, wte)
    hidden_states = jax.block_until_ready(hidden_states)

    # Reference check against plain JAX gather.
    ref = jnp.take(wte, input_ids.reshape(-1), axis=0).reshape(B, S, D)
    assert hidden_states.shape == (B, S, D)
    assert hidden_states.dtype == jnp.float32
    assert jnp.allclose(hidden_states, ref, atol=1e-5, rtol=1e-5), (
        "mismatch vs reference gather"
    )

    print("KERNEL_OK")
</pallas_src>

<mosaic_0001>
module attributes {stable_mosaic.version = 11 : i64} {
  func.func @embedding_kernel(%arg0: i32, %arg1: memref<256x1xi32, #tpu.memory_space<vmem>>, %arg2: memref<512x128xf32, #tpu.memory_space<vmem>>, %arg3: memref<256x128xf32, #tpu.memory_space<vmem>>) attributes {dimension_semantics = [#tpu.dimension_semantics<parallel>], iteration_bounds = array<i64: 1>, scalar_prefetch = 0 : i64, scratch_operands = 0 : i64, tpu.core_type = #tpu.core_type<tc>, window_params = [{transform_indices = @transform_0, window_bounds = array<i64: 256, 1>}, {pipeline_mode = #tpu.pipeline_mode<synchronous>, transform_indices = @transform_1, window_bounds = array<i64: 512, 128>}, {transform_indices = @transform_2, window_bounds = array<i64: 256, 128>}]} {
    %c0 = arith.constant 0 : index
    %c0_0 = arith.constant 0 : index
    %0 = vector.load %arg1[%c0, %c0_0] : memref<256x1xi32, #tpu.memory_space<vmem>>, vector<256x1xi32>
    %1 = tpu.iota {dimensions = array<i32: 1>} : vector<256x512xi32>
    %2 = vector.broadcast %0 : vector<256x1xi32> to vector<256x512xi32>
    %3 = arith.cmpi eq, %2, %1 : vector<256x512xi32>
    %4 = arith.extui %3 : vector<256x512xi1> to vector<256x512xi32>
    %5 = arith.sitofp %4 : vector<256x512xi32> to vector<256x512xf32>
    %c0_1 = arith.constant 0 : index
    %c0_2 = arith.constant 0 : index
    %6 = vector.load %arg2[%c0_1, %c0_2] : memref<512x128xf32, #tpu.memory_space<vmem>>, vector<512x128xf32>
    %cst = arith.constant dense<0.000000e+00> : vector<256x128xf32>
    %7 = tpu.matmul %5, %6, %cst {dimension_numbers = #tpu.dot_dimension_numbers<[1], [0], [0], [1], [0, 0, 1, 1], [], []>} : vector<256x512xf32>, vector<512x128xf32>, vector<256x128xf32> -> vector<256x128xf32>
    %c0_3 = arith.constant 0 : index
    %c0_4 = arith.constant 0 : index
    %8 = vector.load %arg3[%c0_3, %c0_4] : memref<256x128xf32, #tpu.memory_space<vmem>>, vector<256x128xf32>
    tpu.vector_store %arg3[%c0_3, %c0_4], %7 {strides = array<i32>} : memref<256x128xf32, #tpu.memory_space<vmem>>, vector<256x128xf32>,
    return
  }
  func.func @transform_0(%arg0: i32) -> (i32, i32) {
    %c0_i32 = arith.constant 0 : i32
    %c0_i32_0 = arith.constant 0 : i32
    return %arg0, %c0_i32 : i32, i32
  }
  func.func @transform_1(%arg0: i32) -> (i32, i32) {
    %c0_i32 = arith.constant 0 : i32
    %c0_i32_0 = arith.constant 0 : i32
    %c0_i32_1 = arith.constant 0 : i32
    return %c0_i32, %c0_i32_0 : i32, i32
  }
  func.func @transform_2(%arg0: i32) -> (i32, i32) {
    %c0_i32 = arith.constant 0 : i32
    %c0_i32_0 = arith.constant 0 : i32
    return %arg0, %c0_i32 : i32, i32
  }
}

</mosaic_0001>

<llo_original>
// kernel: tpu_custom_call.1
$region0: #{tpu_custom_call.1}
  #allocation0 [shape = 'u32[]', space=smem, size = 0x4, offset = 0x4, fixed_abs, tag = 'smem constant byte address 0x4 - core index']
  #allocation1 [shape = 'u32[72,128]{1,0:T(1,128)}', space=vmem, size = 0x9000, scoped, tag = 'internal scratch']
  %s0 = inlined_call_operand.vmem [shape: s32[256,1], index: 0, kind: input, shape index: {}]
  %s1 = inlined_call_operand.hbm [shape: f32[512,128], index: 1, kind: input, shape index: {}]
  %s2 = inlined_call_operand.hbm [shape: f32[256,128], index: 2, kind: output, shape index: {}]
  %s3 = sld [smem:[#allocation0]]
  $region22: #{tpu_custom_call.1} parent=0
    _
  %s5 = ssub.s32 1, %s3
  %s6 = scalar_select 0, %s5, %s3
  $region1: #{tpu_custom_call.1} parent=0
    #allocation2 [shape = 'u8[262144]{0}', space=vmem, size = 0x40000, scoped, tag = 'input window, operand 1, single buffered']
    #allocation3 [shape = 's32[1]{0}', space=sflag, size = 0x4, scoped, tag = 'scoped memory for tpu_custom_call.1']
    #allocation4 [shape = 's32[1]{0}', space=sflag, size = 0x4, scoped, tag = 'scoped memory for tpu_custom_call.1']
    #allocation5 [shape = 'u8[131072]{0}', space=vmem, size = 0x20000, scoped, tag = 'output window, operand 0, single buffered']
    %7 = vsyncpa [#allocation3], 0
    %8 = vsyncpa [#allocation4], 0
    // Predicated region
    $region2: #{tpu_custom_call.1} parent=1 // pred_check
      _
    $region3: #{tpu_custom_call.1} parent=1 // pred_check_branch
      %10 = sbr.rel (0) target = $region5
    $region4: #{tpu_custom_call.1} parent=1 // pred_region
      _
    $region5: #{tpu_custom_call.1} parent=1 // pred_fallthru
      _
    // Predicated region
    $region6: #{tpu_custom_call.1} parent=1 // pred_check
      _
    $region7: #{tpu_custom_call.1} parent=1 // pred_check_branch
      %12 = sbr.rel (0) target = $region9
    $region8: #{tpu_custom_call.1} parent=1 // pred_region
      %14 = vsyncadd [#allocation3], 0
      %s15 = sshll.u32 %s1, 4
      %s16 = int_to_ptr.hbm [resolvable:$true] %s15
      %s17 = sshll.u32 [#allocation2], 4
      %s18 = int_to_ptr.vmem [resolvable:$true] %s17
      %23 = dma.hbm_to_vmem [thread:$0]  %s16, 8192, %s18, [#allocation3], 128, 128, 8
    $region9: #{tpu_custom_call.1} parent=1 // pred_fallthru
      _
    // Predicated region
    $region10: #{tpu_custom_call.1} parent=1 // pred_check
      _
    $region11: #{tpu_custom_call.1} parent=1 // pred_check_branch
      %25 = sbr.rel (0) target = $region13
    $region12: #{tpu_custom_call.1} parent=1 // pred_region
      %27 = dma.done [#allocation3], 8192
    $region13: #{tpu_custom_call.1} parent=1 // pred_fallthru
      _
    %v28 = vld [vmem:[%s0] sm:$0xff]
    %v29 = vld [vmem:[%s0 + $0x8] sm:$0xff]
    %v30 = vld [vmem:[%s0 + $0x10] sm:$0xff]
    %v31 = vld [vmem:[%s0 + $0x18] sm:$0xff]
    %v32 = vld [vmem:[%s0 + $0x20] sm:$0xff]
    %v33 = vld [vmem:[%s0 + $0x28] sm:$0xff]
    %v34 = vld [vmem:[%s0 + $0x30] sm:$0xff]
    %v35 = vld [vmem:[%s0 + $0x38] sm:$0xff]
    %v36 = vld [vmem:[%s0 + $0x40] sm:$0xff]
    %v37 = vld [vmem:[%s0 + $0x48] sm:$0xff]
    %v38 = vld [vmem:[%s0 + $0x50] sm:$0xff]
    %v39 = vld [vmem:[%s0 + $0x58] sm:$0xff]
    %v40 = vld [vmem:[%s0 + $0x60] sm:$0xff]
    %v41 = vld [vmem:[%s0 + $0x68] sm:$0xff]
    %v42 = vld [vmem:[%s0 + $0x70] sm:$0xff]
    %v43 = vld [vmem:[%s0 + $0x78] sm:$0xff]
    %v44 = vld [vmem:[%s0 + $0x80] sm:$0xff]
    %v45 = vld [vmem:[%s0 + $0x88] sm:$0xff]
    %v46 = vld [vmem:[%s0 + $0x90] sm:$0xff]
    %v47 = vld [vmem:[%s0 + $0x98] sm:$0xff]
    %v48 = vld [vmem:[%s0 + $0xa0] sm:$0xff]
    %v49 = vld [vmem:[%s0 + $0xa8] sm:$0xff]
    %v50 = vld [vmem:[%s0 + $0xb0] sm:$0xff]
    %v51 = vld [vmem:[%s0 + $0xb8] sm:$0xff]
    %v52 = vld [vmem:[%s0 + $0xc0] sm:$0xff]
    %v53 = vld [vmem:[%s0 + $0xc8] sm:$0xff]
    %v54 = vld [vmem:[%s0 + $0xd0] sm:$0xff]
    %v55 = vld [vmem:[%s0 + $0xd8] sm:$0xff]
    %v56 = vld [vmem:[%s0 + $0xe0] sm:$0xff]
    %v57 = vld [vmem:[%s0 + $0xe8] sm:$0xff]
    %v58 = vld [vmem:[%s0 + $0xf0] sm:$0xff]
    %v59 = vld [vmem:[%s0 + $0xf8] sm:$0xff]
    %v60 = vlaneseq
    %v61 = vand.u32 %v60, 127
    %v62 = vadd.s32 %v61, 128
    %v63 = vadd.s32 %v61, 256
    %v64 = vadd.s32 %v61, 384
    %65 = vset.pattern.permute.xlu0 0
    %66 = vperm.xlu0 %65, %v28
    %v67 = vpop.permute.xlu0 %66
    %68 = vset.pattern.permute.xlu0 0
    %69 = vperm.xlu0 %68, %v29
    %v70 = vpop.permute.xlu0 %69
    %71 = vset.pattern.permute.xlu0 0
    %72 = vperm.xlu0 %71, %v30
    %v73 = vpop.permute.xlu0 %72
    %74 = vset.pattern.permute.xlu0 0
    %75 = vperm.xlu0 %74, %v31
    %v76 = vpop.permute.xlu0 %75
    %77 = vset.pattern.permute.xlu0 0
    %78 = vperm.xlu0 %77, %v32
    %v79 = vpop.permute.xlu0 %78
    %80 = vset.pattern.permute.xlu0 0
    %81 = vperm.xlu0 %80, %v33
    %v82 = vpop.permute.xlu0 %81
    %83 = vset.pattern.permute.xlu0 0
    %84 = vperm.xlu0 %83, %v34
    %v85 = vpop.permute.xlu0 %84
    %86 = vset.pattern.permute.xlu0 0
    %87 = vperm.xlu0 %86, %v35
    %v88 = vpop.permute.xlu0 %87
    %89 = vset.pattern.permute.xlu0 0
    %90 = vperm.xlu0 %89, %v36
    %v91 = vpop.permute.xlu0 %90
    %92 = vset.pattern.permute.xlu0 0
    %93 = vperm.xlu0 %92, %v37
    %v94 = vpop.permute.xlu0 %93
    %95 = vset.pattern.permute.xlu0 0
    %96 = vperm.xlu0 %95, %v38
    %v97 = vpop.permute.xlu0 %96
    %98 = vset.pattern.permute.xlu0 0
    %99 = vperm.xlu0 %98, %v39
    %v100 = vpop.permute.xlu0 %99
    %101 = vset.pattern.permute.xlu0 0
    %102 = vperm.xlu0 %101, %v40
    %v103 = vpop.permute.xlu0 %102
    %104 = vset.pattern.permute.xlu0 0
    %105 = vperm.xlu0 %104, %v41
    %v106 = vpop.permute.xlu0 %105
    %107 = vset.pattern.permute.xlu0 0
    %108 = vperm.xlu0 %107, %v42
    %v109 = vpop.permute.xlu0 %108
    %110 = vset.pattern.permute.xlu0 0
    %111 = vperm.xlu0 %110, %v43
    %v112 = vpop.permute.xlu0 %111
    %113 = vset.pattern.permute.xlu0 0
    %114 = vperm.xlu0 %113, %v44
    %v115 = vpop.permute.xlu0 %114
    %116 = vset.pattern.permute.xlu0 0
    %117 = vperm.xlu0 %116, %v45
    %v118 = vpop.permute.xlu0 %117
    %119 = vset.pattern.permute.xlu0 0
    %120 = vperm.xlu0 %119, %v46
    %v121 = vpop.permute.xlu0 %120
    %122 = vset.pattern.permute.xlu0 0
    %123 = vperm.xlu0 %122, %v47
    %v124 = vpop.permute.xlu0 %123
    %125 = vset.pattern.permute.xlu0 0
    %126 = vperm.xlu0 %125, %v48
    %v127 = vpop.permute.xlu0 %126
    %128 = vset.pattern.permute.xlu0 0
    %129 = vperm.xlu0 %128, %v49
    %v130 = vpop.permute.xlu0 %129
    %131 = vset.pattern.permute.xlu0 0
    %132 = vperm.xlu0 %131, %v50
    %v133 = vpop.permute.xlu0 %132
    %134 = vset.pattern.permute.xlu0 0
    %135 = vperm.xlu0 %134, %v51
    %v136 = vpop.permute.xlu0 %135
    %137 = vset.pattern.permute.xlu0 0
    %138 = vperm.xlu0 %137, %v52
    %v139 = vpop.permute.xlu0 %138
    %140 = vset.pattern.permute.xlu0 0
    %141 = vperm.xlu0 %140, %v53
    %v142 = vpop.permute.xlu0 %141
    %143 = vset.pattern.permute.xlu0 0
    %144 = vperm.xlu0 %143, %v54
    %v145 = vpop.permute.xlu0 %144
    %146 = vset.pattern.permute.xlu0 0
    %147 = vperm.xlu0 %146, %v55
    %v148 = vpop.permute.xlu0 %147
    %149 = vset.pattern.permute.xlu0 0
    %150 = vperm.xlu0 %149, %v56
    %v151 = vpop.permute.xlu0 %150
    %152 = vset.pattern.permute.xlu0 0
    %153 = vperm.xlu0 %152, %v57
    %v154 = vpop.permute.xlu0 %153
    %155 = vset.pattern.permute.xlu0 0
    %156 = vperm.xlu0 %155, %v58
    %v157 = vpop.permute.xlu0 %156
    %158 = vset.pattern.permute.xlu0 0
    %159 = vperm.xlu0 %158, %v59
    %v160 = vpop.permute.xlu0 %159
    %vm161 = vcmp.eq.s32.totalorder %v67, %v61
    %vm162 = vcmp.eq.s32.totalorder %v67, %v62
    %vm163 = vcmp.eq.s32.totalorder %v67, %v63
    %vm164 = vcmp.eq.s32.totalorder %v67, %v64
    %vm165 = vcmp.eq.s32.totalorder %v70, %v61
    %vm166 = vcmp.eq.s32.totalorder %v70, %v62
    %vm167 = vcmp.eq.s32.totalorder %v70, %v63
    %vm168 = vcmp.eq.s32.totalorder %v70, %v64
    %vm169 = vcmp.eq.s32.totalorder %v73, %v61
    %vm170 = vcmp.eq.s32.totalorder %v73, %v62
    %vm171 = vcmp.eq.s32.totalorder %v73, %v63
    %vm172 = vcmp.eq.s32.totalorder %v73, %v64
    %vm173 = vcmp.eq.s32.totalorder %v76, %v61
    %vm174 = vcmp.eq.s32.totalorder %v76, %v62
    %vm175 = vcmp.eq.s32.totalorder %v76, %v63
    %vm176 = vcmp.eq.s32.totalorder %v76, %v64
    %vm177 = vcmp.eq.s32.totalorder %v79, %v61
    %vm178 = vcmp.eq.s32.totalorder %v79, %v62
    %vm179 = vcmp.eq.s32.totalorder %v79, %v63
    %vm180 = vcmp.eq.s32.totalorder %v79, %v64
    %vm181 = vcmp.eq.s32.totalorder %v82, %v61
    %vm182 = vcmp.eq.s32.totalorder %v82, %v62
    %vm183 = vcmp.eq.s32.totalorder %v82, %v63
    %vm184 = vcmp.eq.s32.totalorder %v82, %v64
    %vm185 = vcmp.eq.s32.totalorder %v85, %v61
    %vm186 = vcmp.eq.s32.totalorder %v85, %v62
    %vm187 = vcmp.eq.s32.totalorder %v85, %v63
    %vm188 = vcmp.eq.s32.totalorder %v85, %v64
    %vm189 = vcmp.eq.s32.totalorder %v88, %v61
    %vm190 = vcmp.eq.s32.totalorder %v88, %v62
    %vm191 = vcmp.eq.s32.totalorder %v88, %v63
    %vm192 = vcmp.eq.s32.totalorder %v88, %v64
    %vm193 = vcmp.eq.s32.totalorder %v91, %v61
    %vm194 = vcmp.eq.s32.totalorder %v91, %v62
    %vm195 = vcmp.eq.s32.totalorder %v91, %v63
    %vm196 = vcmp.eq.s32.totalorder %v91, %v64
    %vm197 = vcmp.eq.s32.totalorder %v94, %v61
    %vm198 = vcmp.eq.s32.totalorder %v94, %v62
    %vm199 = vcmp.eq.s32.totalorder %v94, %v63
    %vm200 = vcmp.eq.s32.totalorder %v94, %v64
    %vm201 = vcmp.eq.s32.totalorder %v97, %v61
    %vm202 = vcmp.eq.s32.totalorder %v97, %v62
    %vm203 = vcmp.eq.s32.totalorder %v97, %v63
    %vm204 = vcmp.eq.s32.totalorder %v97, %v64
    %vm205 = vcmp.eq.s32.totalorder %v100, %v61
    %vm206 = vcmp.eq.s32.totalorder %v100, %v62
    %vm207 = vcmp.eq.s32.totalorder %v100, %v63
    %vm208 = vcmp.eq.s32.totalorder %v100, %v64
    %vm209 = vcmp.eq.s32.totalorder %v103, %v61
    %vm210 = vcmp.eq.s32.totalorder %v103, %v62
    %vm211 = vcmp.eq.s32.totalorder %v103, %v63
    %vm212 = vcmp.eq.s32.totalorder %v103, %v64
    %vm213 = vcmp.eq.s32.totalorder %v106, %v61
    %vm214 = vcmp.eq.s32.totalorder %v106, %v62
    %vm215 = vcmp.eq.s32.totalorder %v106, %v63
    %vm216 = vcmp.eq.s32.totalorder %v106, %v64
    %vm217 = vcmp.eq.s32.totalorder %v109, %v61
    %vm218 = vcmp.eq.s32.totalorder %v109, %v62
    %vm219 = vcmp.eq.s32.totalorder %v109, %v63
    %vm220 = vcmp.eq.s32.totalorder %v109, %v64
    %vm221 = vcmp.eq.s32.totalorder %v112, %v61
    %vm222 = vcmp.eq.s32.totalorder %v112, %v62
    %vm223 = vcmp.eq.s32.totalorder %v112, %v63
    %vm224 = vcmp.eq.s32.totalorder %v112, %v64
    %vm225 = vcmp.eq.s32.totalorder %v115, %v61
    %vm226 = vcmp.eq.s32.totalorder %v115, %v62
    %vm227 = vcmp.eq.s32.totalorder %v115, %v63
    %vm228 = vcmp.eq.s32.totalorder %v115, %v64
    %vm229 = vcmp.eq.s32.totalorder %v118, %v61
    %vm230 = vcmp.eq.s32.totalorder %v118, %v62
    %vm231 = vcmp.eq.s32.totalorder %v118, %v63
    %vm232 = vcmp.eq.s32.totalorder %v118, %v64
    %vm233 = vcmp.eq.s32.totalorder %v121, %v61
    %vm234 = vcmp.eq.s32.totalorder %v121, %v62
    %vm235 = vcmp.eq.s32.totalorder %v121, %v63
    %vm236 = vcmp.eq.s32.totalorder %v121, %v64
    %vm237 = vcmp.eq.s32.totalorder %v124, %v61
    %vm238 = vcmp.eq.s32.totalorder %v124, %v62
    %vm239 = vcmp.eq.s32.totalorder %v124, %v63
    %vm240 = vcmp.eq.s32.totalorder %v124, %v64
    %vm241 = vcmp.eq.s32.totalorder %v127, %v61
    %vm242 = vcmp.eq.s32.totalorder %v127, %v62
    %vm243 = vcmp.eq.s32.totalorder %v127, %v63
    %vm244 = vcmp.eq.s32.totalorder %v127, %v64
    %vm245 = vcmp.eq.s32.totalorder %v130, %v61
    %vm246 = vcmp.eq.s32.totalorder %v130, %v62
    %vm247 = vcmp.eq.s32.totalorder %v130, %v63
    %vm248 = vcmp.eq.s32.totalorder %v130, %v64
    %vm249 = vcmp.eq.s32.totalorder %v133, %v61
    %vm250 = vcmp.eq.s32.totalorder %v133, %v62
    %vm251 = vcmp.eq.s32.totalorder %v133, %v63
    %vm252 = vcmp.eq.s32.totalorder %v133, %v64
    %vm253 = vcmp.eq.s32.totalorder %v136, %v61
    %vm254 = vcmp.eq.s32.totalorder %v136, %v62
    %vm255 = vcmp.eq.s32.totalorder %v136, %v63
    %vm256 = vcmp.eq.s32.totalorder %v136, %v64
    %vm257 = vcmp.eq.s32.totalorder %v139, %v61
    %vm258 = vcmp.eq.s32.totalorder %v139, %v62
    %vm259 = vcmp.eq.s32.totalorder %v139, %v63
    %vm260 = vcmp.eq.s32.totalorder %v139, %v64
    %vm261 = vcmp.eq.s32.totalorder %v142, %v61
    %vm262 = vcmp.eq.s32.totalorder %v142, %v62
    %vm263 = vcmp.eq.s32.totalorder %v142, %v63
    %vm264 = vcmp.eq.s32.totalorder %v142, %v64
    %vm265 = vcmp.eq.s32.totalorder %v145, %v61
    %vm266 = vcmp.eq.s32.totalorder %v145, %v62
    %vm267 = vcmp.eq.s32.totalorder %v145, %v63
    %vm268 = vcmp.eq.s32.totalorder %v145, %v64
    %vm269 = vcmp.eq.s32.totalorder %v148, %v61
    %vm270 = vcmp.eq.s32.totalorder %v148, %v62
    %vm271 = vcmp.eq.s32.totalorder %v148, %v63
    %vm272 = vcmp.eq.s32.totalorder %v148, %v64
    %vm273 = vcmp.eq.s32.totalorder %v151, %v61
    %vm274 = vcmp.eq.s32.totalorder %v151, %v62
    %vm275 = vcmp.eq.s32.totalorder %v151, %v63
    %vm276 = vcmp.eq.s32.totalorder %v151, %v64
    %vm277 = vcmp.eq.s32.totalorder %v154, %v61
    %vm278 = vcmp.eq.s32.totalorder %v154, %v62
    %vm279 = vcmp.eq.s32.totalorder %v154, %v63
    %vm280 = vcmp.eq.s32.totalorder %v154, %v64
    %vm281 = vcmp.eq.s32.totalorder %v157, %v61
    %vm282 = vcmp.eq.s32.totalorder %v157, %v62
    %vm283 = vcmp.eq.s32.totalorder %v157, %v63
    %vm284 = vcmp.eq.s32.totalorder %v157, %v64
    %vm285 = vcmp.eq.s32.totalorder %v160, %v61
    %vm286 = vcmp.eq.s32.totalorder %v160, %v62
    %vm287 = vcmp.eq.s32.totalorder %v160, %v63
    %vm288 = vcmp.eq.s32.totalorder %v160, %v64
    %v289 = vsel %vm161, 1, 0
    %v290 = vsel %vm162, 1, 0
    %v291 = vsel %vm163, 1, 0
    %v292 = vsel %vm164, 1, 0
    %v293 = vsel %vm165, 1, 0
    %v294 = vsel %vm166, 1, 0
    %v295 = vsel %vm167, 1, 0
    %v296 = vsel %vm168, 1, 0
    %v297 = vsel %vm169, 1, 0
    %v298 = vsel %vm170, 1, 0
    %v299 = vsel %vm171, 1, 0
    %v300 = vsel %vm172, 1, 0
    %v301 = vsel %vm173, 1, 0
    %v302 = vsel %vm174, 1, 0
    %v303 = vsel %vm175, 1, 0
    %v304 = vsel %vm176, 1, 0
    %v305 = vsel %vm177, 1, 0
    %v306 = vsel %vm178, 1, 0
    %v307 = vsel %vm179, 1, 0
    %v308 = vsel %vm180, 1, 0
    %v309 = vsel %vm181, 1, 0
    %v310 = vsel %vm182, 1, 0
    %v311 = vsel %vm183, 1, 0
    %v312 = vsel %vm184, 1, 0
    %v313 = vsel %vm185, 1, 0
    %v314 = vsel %vm186, 1, 0
    %v315 = vsel %vm187, 1, 0
    %v316 = vsel %vm188, 1, 0
    %v317 = vsel %vm189, 1, 0
    %v318 = vsel %vm190, 1, 0
    %v319 = vsel %vm191, 1, 0
    %v320 = vsel %vm192, 1, 0
    %v321 = vsel %vm193, 1, 0
    %v322 = vsel %vm194, 1, 0
    %v323 = vsel %vm195, 1, 0
    %v324 = vsel %vm196, 1, 0
    %v325 = vsel %vm197, 1, 0
    %v326 = vsel %vm198, 1, 0
    %v327 = vsel %vm199, 1, 0
    %v328 = vsel %vm200, 1, 0
    %v329 = vsel %vm201, 1, 0
    %v330 = vsel %vm202, 1, 0
    %v331 = vsel %vm203, 1, 0
    %v332 = vsel %vm204, 1, 0
    %v333 = vsel %vm205, 1, 0
    %v334 = vsel %vm206, 1, 0
    %v335 = vsel %vm207, 1, 0
    %v336 = vsel %vm208, 1, 0
    %v337 = vsel %vm209, 1, 0
    %v338 = vsel %vm210, 1, 0
    %v339 = vsel %vm211, 1, 0
    %v340 = vsel %vm212, 1, 0
    %v341 = vsel %vm213, 1, 0
    %v342 = vsel %vm214, 1, 0
    %v343 = vsel %vm215, 1, 0
    %v344 = vsel %vm216, 1, 0
    %v345 = vsel %vm217, 1, 0
    %v346 = vsel %vm218, 1, 0
    %v347 = vsel %vm219, 1, 0
    %v348 = vsel %vm220, 1, 0
    %v349 = vsel %vm221, 1, 0
    %v350 = vsel %vm222, 1, 0
    %v351 = vsel %vm223, 1, 0
    %v352 = vsel %vm224, 1, 0
    %v353 = vsel %vm225, 1, 0
    %v354 = vsel %vm226, 1, 0
    %v355 = vsel %vm227, 1, 0
    %v356 = vsel %vm228, 1, 0
    %v357 = vsel %vm229, 1, 0
    %v358 = vsel %vm230, 1, 0
    %v359 = vsel %vm231, 1, 0
    %v360 = vsel %vm232, 1, 0
    %v361 = vsel %vm233, 1, 0
    %v362 = vsel %vm234, 1, 0
    %v363 = vsel %vm235, 1, 0
    %v364 = vsel %vm236, 1, 0
    %v365 = vsel %vm237, 1, 0
    %v366 = vsel %vm238, 1, 0
    %v367 = vsel %vm239, 1, 0
    %v368 = vsel %vm240, 1, 0
    %v369 = vsel %vm241, 1, 0
    %v370 = vsel %vm242, 1, 0
    %v371 = vsel %vm243, 1, 0
    %v372 = vsel %vm244, 1, 0
    %v373 = vsel %vm245, 1, 0
    %v374 = vsel %vm246, 1, 0
    %v375 = vsel %vm247, 1, 0
    %v376 = vsel %vm248, 1, 0
    %v377 = vsel %vm249, 1, 0
    %v378 = vsel %vm250, 1, 0
    %v379 = vsel %vm251, 1, 0
    %v380 = vsel %vm252, 1, 0
    %v381 = vsel %vm253, 1, 0
    %v382 = vsel %vm254, 1, 0
    %v383 = vsel %vm255, 1, 0
    %v384 = vsel %vm256, 1, 0
    %v385 = vsel %vm257, 1, 0
    %v386 = vsel %vm258, 1, 0
    %v387 = vsel %vm259, 1, 0
    %v388 = vsel %vm260, 1, 0
    %v389 = vsel %vm261, 1, 0
    %v390 = vsel %vm262, 1, 0
    %v391 = vsel %vm263, 1, 0
    %v392 = vsel %vm264, 1, 0
    %v393 = vsel %vm265, 1, 0
    %v394 = vsel %vm266, 1, 0
    %v395 = vsel %vm267, 1, 0
    %v396 = vsel %vm268, 1, 0
    %v397 = vsel %vm269, 1, 0
    %v398 = vsel %vm270, 1, 0
    %v399 = vsel %vm271, 1, 0
    %v400 = vsel %vm272, 1, 0
    %v401 = vsel %vm273, 1, 0
    %v402 = vsel %vm274, 1, 0
    %v403 = vsel %vm275, 1, 0
    %v404 = vsel %vm276, 1, 0
    %v405 = vsel %vm277, 1, 0
    %v406 = vsel %vm278, 1, 0
    %v407 = vsel %vm279, 1, 0
    %v408 = vsel %vm280, 1, 0
    %v409 = vsel %vm281, 1, 0
    %v410 = vsel %vm282, 1, 0
    %v411 = vsel %vm283, 1, 0
    %v412 = vsel %vm284, 1, 0
    %v413 = vsel %vm285, 1, 0
    %v414 = vsel %vm286, 1, 0
    %v415 = vsel %vm287, 1, 0
    %v416 = vsel %vm288, 1, 0
    %v417 = vcvt.s32.f32 %v289
    %v418 = vcvt.s32.f32 %v290
    %v419 = vcvt.s32.f32 %v291
    %v420 = vcvt.s32.f32 %v292
    %v421 = vcvt.s32.f32 %v293
    %v422 = vcvt.s32.f32 %v294
    %v423 = vcvt.s32.f32 %v295
    %v424 = vcvt.s32.f32 %v296
    %v425 = vcvt.s32.f32 %v297
    %v426 = vcvt.s32.f32 %v298
    %v427 = vcvt.s32.f32 %v299
    %v428 = vcvt.s32.f32 %v300
    %v429 = vcvt.s32.f32 %v301
    %v430 = vcvt.s32.f32 %v302
    %v431 = vcvt.s32.f32 %v303
    %v432 = vcvt.s32.f32 %v304
    %v433 = vcvt.s32.f32 %v305
    %v434 = vcvt.s32.f32 %v306
    %v435 = vcvt.s32.f32 %v307
    %v436 = vcvt.s32.f32 %v308
    %v437 = vcvt.s32.f32 %v309
    %v438 = vcvt.s32.f32 %v310
    %v439 = vcvt.s32.f32 %v311
    %v440 = vcvt.s32.f32 %v312
    %v441 = vcvt.s32.f32 %v313
    %v442 = vcvt.s32.f32 %v314
    %v443 = vcvt.s32.f32 %v315
    %v444 = vcvt.s32.f32 %v316
    %v445 = vcvt.s32.f32 %v317
    %v446 = vcvt.s32.f32 %v318
    %v447 = vcvt.s32.f32 %v319
    %v448 = vcvt.s32.f32 %v320
    %v449 = vcvt.s32.f32 %v321
    %v450 = vcvt.s32.f32 %v322
    %v451 = vcvt.s32.f32 %v323
    %v452 = vcvt.s32.f32 %v324
    %v453 = vcvt.s32.f32 %v325
    %v454 = vcvt.s32.f32 %v326
    %v455 = vcvt.s32.f32 %v327
    %v456 = vcvt.s32.f32 %v328
    %v457 = vcvt.s32.f32 %v329
    %v458 = vcvt.s32.f32 %v330
    %v459 = vcvt.s32.f32 %v331
    %v460 = vcvt.s32.f32 %v332
    %v461 = vcvt.s32.f32 %v333
    %v462 = vcvt.s32.f32 %v334
    %v463 = vcvt.s32.f32 %v335
    %v464 = vcvt.s32.f32 %v336
    %v465 = vcvt.s32.f32 %v337
    %v466 = vcvt.s32.f32 %v338
    %v467 = vcvt.s32.f32 %v339
    %v468 = vcvt.s32.f32 %v340
    %v469 = vcvt.s32.f32 %v341
    %v470 = vcvt.s32.f32 %v342
    %v471 = vcvt.s32.f32 %v343
    %v472 = vcvt.s32.f32 %v344
    %v473 = vcvt.s32.f32 %v345
    %v474 = vcvt.s32.f32 %v346
    %v475 = vcvt.s32.f32 %v347
    %v476 = vcvt.s32.f32 %v348
    %v477 = vcvt.s32.f32 %v349
    %v478 = vcvt.s32.f32 %v350
    %v479 = vcvt.s32.f32 %v351
    %v480 = vcvt.s32.f32 %v352
    %v481 = vcvt.s32.f32 %v353
    %v482 = vcvt.s32.f32 %v354
    %v483 = vcvt.s32.f32 %v355
    %v484 = vcvt.s32.f32 %v356
    %v485 = vcvt.s32.f32 %v357
    %v486 = vcvt.s32.f32 %v358
    %v487 = vcvt.s32.f32 %v359
    %v488 = vcvt.s32.f32 %v360
    %v489 = vcvt.s32.f32 %v361
    %v490 = vcvt.s32.f32 %v362
    %v491 = vcvt.s32.f32 %v363
    %v492 = vcvt.s32.f32 %v364
    %v493 = vcvt.s32.f32 %v365
    %v494 = vcvt.s32.f32 %v366
    %v495 = vcvt.s32.f32 %v367
    %v496 = vcvt.s32.f32 %v368
    %v497 = vcvt.s32.f32 %v369
    %v498 = vcvt.s32.f32 %v370
    %v499 = vcvt.s32.f32 %v371
    %v500 = vcvt.s32.f32 %v372
    %v501 = vcvt.s32.f32 %v373
    %v502 = vcvt.s32.f32 %v374
    %v503 = vcvt.s32.f32 %v375
    %v504 = vcvt.s32.f32 %v376
    %v505 = vcvt.s32.f32 %v377
    %v506 = vcvt.s32.f32 %v378
    %v507 = vcvt.s32.f32 %v379
    %v508 = vcvt.s32.f32 %v380
    %v509 = vcvt.s32.f32 %v381
    %v510 = vcvt.s32.f32 %v382
    %v511 = vcvt.s32.f32 %v383
    %v512 = vcvt.s32.f32 %v384
    %v513 = vcvt.s32.f32 %v385
    %v514 = vcvt.s32.f32 %v386
    %v515 = vcvt.s32.f32 %v387
    %v516 = vcvt.s32.f32 %v388
    %v517 = vcvt.s32.f32 %v389
    %v518 = vcvt.s32.f32 %v390
    %v519 = vcvt.s32.f32 %v391
    %v520 = vcvt.s32.f32 %v392
    %v521 = vcvt.s32.f32 %v393
    %v522 = vcvt.s32.f32 %v394
    %v523 = vcvt.s32.f32 %v395
    %v524 = vcvt.s32.f32 %v396
    %v525 = vcvt.s32.f32 %v397
    %v526 = vcvt.s32.f32 %v398
    %v527 = vcvt.s32.f32 %v399
    %v528 = vcvt.s32.f32 %v400
    %v529 = vcvt.s32.f32 %v401
    %v530 = vcvt.s32.f32 %v402
    %v531 = vcvt.s32.f32 %v403
    %v532 = vcvt.s32.f32 %v404
    %v533 = vcvt.s32.f32 %v405
    %v534 = vcvt.s32.f32 %v406
    %v535 = vcvt.s32.f32 %v407
    %v536 = vcvt.s32.f32 %v408
    %v537 = vcvt.s32.f32 %v409
    %v538 = vcvt.s32.f32 %v410
    %v539 = vcvt.s32.f32 %v411
    %v540 = vcvt.s32.f32 %v412
    %v541 = vcvt.s32.f32 %v413
    %v542 = vcvt.s32.f32 %v414
    %v543 = vcvt.s32.f32 %v415
    %v544 = vcvt.s32.f32 %v416
    %v545 = vld [vmem:[#allocation2] sm:$0xff]
    %v546 = vld [vmem:[#allocation2 + $0x8] sm:$0xff]
    %v547 = vld [vmem:[#allocation2 + $0x10] sm:$0xff]
    %v548 = vld [vmem:[#allocation2 + $0x18] sm:$0xff]
    %v549 = vld [vmem:[#allocation2 + $0x20] sm:$0xff]
    %v550 = vld [vmem:[#allocation2 + $0x28] sm:$0xff]
    %v551 = vld [vmem:[#allocation2 + $0x30] sm:$0xff]
    %v552 = vld [vmem:[#allocation2 + $0x38] sm:$0xff]
    %v553 = vld [vmem:[#allocation2 + $0x40] sm:$0xff]
    %v554 = vld [vmem:[#allocation2 + $0x48] sm:$0xff]
    %v555 = vld [vmem:[#allocation2 + $0x50] sm:$0xff]
    %v556 = vld [vmem:[#allocation2 + $0x58] sm:$0xff]
    %v557 = vld [vmem:[#allocation2 + $0x60] sm:$0xff]
    %v558 = vld [vmem:[#allocation2 + $0x68] sm:$0xff]
    %v559 = vld [vmem:[#allocation2 + $0x70] sm:$0xff]
    %v560 = vld [vmem:[#allocation2 + $0x78] sm:$0xff]
    %v561 = vld [vmem:[#allocation2 + $0x80] sm:$0xff]
    %v562 = vld [vmem:[#allocation2 + $0x88] sm:$0xff]
    %v563 = vld [vmem:[#allocation2 + $0x90] sm:$0xff]
    %v564 = vld [vmem:[#allocation2 + $0x98] sm:$0xff]
    %v565 = vld [vmem:[#allocation2 + $0xa0] sm:$0xff]
    %v566 = vld [vmem:[#allocation2 + $0xa8] sm:$0xff]
    %v567 = vld [vmem:[#allocation2 + $0xb0] sm:$0xff]
    %v568 = vld [vmem:[#allocation2 + $0xb8] sm:$0xff]
    %v569 = vld [vmem:[#allocation2 + $0xc0] sm:$0xff]
    %v570 = vld [vmem:[#allocation2 + $0xc8] sm:$0xff]
    %v571 = vld [vmem:[#allocation2 + $0xd0] sm:$0xff]
    %v572 = vld [vmem:[#allocation2 + $0xd8] sm:$0xff]
    %v573 = vld [vmem:[#allocation2 + $0xe0] sm:$0xff]
    %v574 = vld [vmem:[#allocation2 + $0xe8] sm:$0xff]
    %v575 = vld [vmem:[#allocation2 + $0xf0] sm:$0xff]
    %v576 = vld [vmem:[#allocation2 + $0xf8] sm:$0xff]
    %v577 = vld [vmem:[#allocation2 + $0x100] sm:$0xff]
    %v578 = vld [vmem:[#allocation2 + $0x108] sm:$0xff]
    %v579 = vld [vmem:[#allocation2 + $0x110] sm:$0xff]
    %v580 = vld [vmem:[#allocation2 + $0x118] sm:$0xff]
    %v581 = vld [vmem:[#allocation2 + $0x120] sm:$0xff]
    %v582 = vld [vmem:[#allocation2 + $0x128] sm:$0xff]
    %v583 = vld [vmem:[#allocation2 + $0x130] sm:$0xff]
    %v584 = vld [vmem:[#allocation2 + $0x138] sm:$0xff]
    %v585 = vld [vmem:[#allocation2 + $0x140] sm:$0xff]
    %v586 = vld [vmem:[#allocation2 + $0x148] sm:$0xff]
    %v587 = vld [vmem:[#allocation2 + $0x150] sm:$0xff]
    %v588 = vld [vmem:[#allocation2 + $0x158] sm:$0xff]
    %v589 = vld [vmem:[#allocation2 + $0x160] sm:$0xff]
    %v590 = vld [vmem:[#allocation2 + $0x168] sm:$0xff]
    %v591 = vld [vmem:[#allocation2 + $0x170] sm:$0xff]
    %v592 = vld [vmem:[#allocation2 + $0x178] sm:$0xff]
    %v593 = vld [vmem:[#allocation2 + $0x180] sm:$0xff]
    %v594 = vld [vmem:[#allocation2 + $0x188] sm:$0xff]
    %v595 = vld [vmem:[#allocation2 + $0x190] sm:$0xff]
    %v596 = vld [vmem:[#allocation2 + $0x198] sm:$0xff]
    %v597 = vld [vmem:[#allocation2 + $0x1a0] sm:$0xff]
    %v598 = vld [vmem:[#allocation2 + $0x1a8] sm:$0xff]
    %v599 = vld [vmem:[#allocation2 + $0x1b0] sm:$0xff]
    %v600 = vld [vmem:[#allocation2 + $0x1b8] sm:$0xff]
    %v601 = vld [vmem:[#allocation2 + $0x1c0] sm:$0xff]
    %v602 = vld [vmem:[#allocation2 + $0x1c8] sm:$0xff]
    %v603 = vld [vmem:[#allocation2 + $0x1d0] sm:$0xff]
    %v604 = vld [vmem:[#allocation2 + $0x1d8] sm:$0xff]
    %v605 = vld [vmem:[#allocation2 + $0x1e0] sm:$0xff]
    %v606 = vld [vmem:[#allocation2 + $0x1e8] sm:$0xff]
    %v607 = vld [vmem:[#allocation2 + $0x1f0] sm:$0xff]
    %v608 = vld [vmem:[#allocation2 + $0x1f8] sm:$0xff]
    %609 = vmatpush.msra.mxu0 %v560
    %610 = vmatpush.msra.mxu0 %v559
    %611 = vmatpush.msra.mxu0 %v558
    %612 = vmatpush.msra.mxu0 %v557
    %613 = vmatpush.msra.mxu0 %v556
    %614 = vmatpush.msra.mxu0 %v555
    %615 = vmatpush.msra.mxu0 %v554
    %616 = vmatpush.msra.mxu0 %v553
    %617 = vmatpush.msra.mxu0 %v552
    %618 = vmatpush.msra.mxu0 %v551
    %619 = vmatpush.msra.mxu0 %v550
    %620 = vmatpush.msra.mxu0 %v549
    %621 = vmatpush.msra.mxu0 %v548
    %622 = vmatpush.msra.mxu0 %v547
    %623 = vmatpush.msra.mxu0 %v546
    %624 = vmatpush.msra.mxu0 %v545
    %625 = vmatmul.f32.gmra.mxu0 %v417
    %v626 = vpop.f32.mrf.mxu0
    %v627 = vadd.f32 0.0, %v626
    %628 = vmatmul.f32.gmra.mxu0 %v421
    %v629 = vpop.f32.mrf.mxu0
    %v630 = vadd.f32 0.0, %v629
    %631 = vmatmul.f32.gmra.mxu0 %v425
    %v632 = vpop.f32.mrf.mxu0
    %v633 = vadd.f32 0.0, %v632
    %634 = vmatmul.f32.gmra.mxu0 %v429
    %v635 = vpop.f32.mrf.mxu0
    %v636 = vadd.f32 0.0, %v635
    %637 = vmatmul.f32.gmra.mxu0 %v433
    %v638 = vpop.f32.mrf.mxu0
    %v639 = vadd.f32 0.0, %v638
    %640 = vmatmul.f32.gmra.mxu0 %v437
    %v641 = vpop.f32.mrf.mxu0
    %v642 = vadd.f32 0.0, %v641
    %643 = vmatmul.f32.gmra.mxu0 %v441
    %v644 = vpop.f32.mrf.mxu0
    %v645 = vadd.f32 0.0, %v644
    %646 = vmatmul.f32.gmra.mxu0 %v445
    %v647 = vpop.f32.mrf.mxu0
    %v648 = vadd.f32 0.0, %v647
    %649 = vmatmul.f32.gmra.mxu0 %v449
    %v650 = vpop.f32.mrf.mxu0
    %v651 = vadd.f32 0.0, %v650
    %652 = vmatmul.f32.gmra.mxu0 %v453
    %v653 = vpop.f32.mrf.mxu0
    %v654 = vadd.f32 0.0, %v653
    %655 = vmatmul.f32.gmra.mxu0 %v457
    %v656 = vpop.f32.mrf.mxu0
    %v657 = vadd.f32 0.0, %v656
    %658 = vmatmul.f32.gmra.mxu0 %v461
    %v659 = vpop.f32.mrf.mxu0
    %v660 = vadd.f32 0.0, %v659
    %661 = vmatmul.f32.gmra.mxu0 %v465
    %v662 = vpop.f32.mrf.mxu0
    %v663 = vadd.f32 0.0, %v662
    %664 = vmatmul.f32.gmra.mxu0 %v469
    %v665 = vpop.f32.mrf.mxu0
    %v666 = vadd.f32 0.0, %v665
    %667 = vmatmul.f32.gmra.mxu0 %v473
    %v668 = vpop.f32.mrf.mxu0
    %v669 = vadd.f32 0.0, %v668
    %670 = vmatmul.f32.gmra.mxu0 %v477
    %v671 = vpop.f32.mrf.mxu0
    %v672 = vadd.f32 0.0, %v671
    %673 = vmatmul.f32.gmra.mxu0 %v481
    %v674 = vpop.f32.mrf.mxu0
    %v675 = vadd.f32 0.0, %v674
    %676 = vmatmul.f32.gmra.mxu0 %v485
    %v677 = vpop.f32.mrf.mxu0
    %v678 = vadd.f32 0.0, %v677
    %679 = vmatmul.f32.gmra.mxu0 %v489
    %v680 = vpop.f32.mrf.mxu0
    %v681 = vadd.f32 0.0, %v680
    %682 = vmatmul.f32.gmra.mxu0 %v493
    %v683 = vpop.f32.mrf.mxu0
    %v684 = vadd.f32 0.0, %v683
    %685 = vmatmul.f32.gmra.mxu0 %v497
    %v686 = vpop.f32.mrf.mxu0
    %v687 = vadd.f32 0.0, %v686
    %688 = vmatmul.f32.gmra.mxu0 %v501
    %v689 = vpop.f32.mrf.mxu0
    %v690 = vadd.f32 0.0, %v689
    %691 = vmatmul.f32.gmra.mxu0 %v505
    %v692 = vpop.f32.mrf.mxu0
    %v693 = vadd.f32 0.0, %v692
    %694 = vmatmul.f32.gmra.mxu0 %v509
    %v695 = vpop.f32.mrf.mxu0
    %v696 = vadd.f32 0.0, %v695
    %697 = vmatmul.f32.gmra.mxu0 %v513
    %v698 = vpop.f32.mrf.mxu0
    %v699 = vadd.f32 0.0, %v698
    %700 = vmatmul.f32.gmra.mxu0 %v517
    %v701 = vpop.f32.mrf.mxu0
    %v702 = vadd.f32 0.0, %v701
    %703 = vmatmul.f32.gmra.mxu0 %v521
    %v704 = vpop.f32.mrf.mxu0
    %v705 = vadd.f32 0.0, %v704
    %706 = vmatmul.f32.gmra.mxu0 %v525
    %v707 = vpop.f32.mrf.mxu0
    %v708 = vadd.f32 0.0, %v707
    %709 = vmatmul.f32.gmra.mxu0 %v529
    %v710 = vpop.f32.mrf.mxu0
    %v711 = vadd.f32 0.0, %v710
    %712 = vmatmul.f32.gmra.mxu0 %v533
    %v713 = vpop.f32.mrf.mxu0
    %v714 = vadd.f32 0.0, %v713
    %715 = vmatmul.f32.gmra.mxu0 %v537
    %v716 = vpop.f32.mrf.mxu0
    %v717 = vadd.f32 0.0, %v716
    %718 = vmatmul.f32.gmra.mxu0 %v541
    %v719 = vpop.f32.mrf.mxu0
    %v720 = vadd.f32 0.0, %v719
    %721 = vdwg.mxu0
    %722 = vmatpush.msra.mxu0 %v576
    %723 = vmatpush.msra.mxu0 %v575
    %724 = vmatpush.msra.mxu0 %v574
    %725 = vmatpush.msra.mxu0 %v573
    %726 = vmatpush.msra.mxu0 %v572
    %727 = vmatpush.msra.mxu0 %v571
    %728 = vmatpush.msra.mxu0 %v570
    %729 = vmatpush.msra.mxu0 %v569
    %730 = vmatpush.msra.mxu0 %v568
    %731 = vmatpush.msra.mxu0 %v567
    %732 = vmatpush.msra.mxu0 %v566
    %733 = vmatpush.msra.mxu0 %v565
    %734 = vmatpush.msra.mxu0 %v564
    %735 = vmatpush.msra.mxu0 %v563
    %736 = vmatpush.msra.mxu0 %v562
    %737 = vmatpush.msra.mxu0 %v561
    %738 = vmatmul.f32.gmra.mxu0 %v418
    %v739 = vpop.f32.mrf.mxu0
    %v740 = vadd.f32 %v627, %v739
    %741 = vmatmul.f32.gmra.mxu0 %v422
    %v742 = vpop.f32.mrf.mxu0
    %v743 = vadd.f32 %v630, %v742
    %744 = vmatmul.f32.gmra.mxu0 %v426
    %v745 = vpop.f32.mrf.mxu0
    %v746 = vadd.f32 %v633, %v745
    %747 = vmatmul.f32.gmra.mxu0 %v430
    %v748 = vpop.f32.mrf.mxu0
    %v749 = vadd.f32 %v636, %v748
    %750 = vmatmul.f32.gmra.mxu0 %v434
    %v751 = vpop.f32.mrf.mxu0
    %v752 = vadd.f32 %v639, %v751
    %753 = vmatmul.f32.gmra.mxu0 %v438
    %v754 = vpop.f32.mrf.mxu0
    %v755 = vadd.f32 %v642, %v754
    %756 = vmatmul.f32.gmra.mxu0 %v442
    %v757 = vpop.f32.mrf.mxu0
    %v758 = vadd.f32 %v645, %v757
    %759 = vmatmul.f32.gmra.mxu0 %v446
    %v760 = vpop.f32.mrf.mxu0
    %v761 = vadd.f32 %v648, %v760
    %762 = vmatmul.f32.gmra.mxu0 %v450
    %v763 = vpop.f32.mrf.mxu0
    %v764 = vadd.f32 %v651, %v763
    %765 = vmatmul.f32.gmra.mxu0 %v454
    %v766 = vpop.f32.mrf.mxu0
    %v767 = vadd.f32 %v654, %v766
    %768 = vmatmul.f32.gmra.mxu0 %v458
    %v769 = vpop.f32.mrf.mxu0
    %v770 = vadd.f32 %v657, %v769
    %771 = vmatmul.f32.gmra.mxu0 %v462
    %v772 = vpop.f32.mrf.mxu0
    %v773 = vadd.f32 %v660, %v772
    %774 = vmatmul.f32.gmra.mxu0 %v466
    %v775 = vpop.f32.mrf.mxu0
    %v776 = vadd.f32 %v663, %v775
    %777 = vmatmul.f32.gmra.mxu0 %v470
    %v778 = vpop.f32.mrf.mxu0
    %v779 = vadd.f32 %v666, %v778
    %780 = vmatmul.f32.gmra.mxu0 %v474
    %v781 = vpop.f32.mrf.mxu0
    %v782 = vadd.f32 %v669, %v781
    %783 = vmatmul.f32.gmra.mxu0 %v478
    %v784 = vpop.f32.mrf.mxu0
    %v785 = vadd.f32 %v672, %v784
    %786 = vmatmul.f32.gmra.mxu0 %v482
    %v787 = vpop.f32.mrf.mxu0
    %v788 = vadd.f32 %v675, %v787
    %789 = vmatmul.f32.gmra.mxu0 %v486
    %v790 = vpop.f32.mrf.mxu0
    %v791 = vadd.f32 %v678, %v790
    %792 = vmatmul.f32.gmra.mxu0 %v490
    %v793 = vpop.f32.mrf.mxu0
    %v794 = vadd.f32 %v681, %v793
    %795 = vmatmul.f32.gmra.mxu0 %v494
    %v796 = vpop.f32.mrf.mxu0
    %v797 = vadd.f32 %v684, %v796
    %798 = vmatmul.f32.gmra.mxu0 %v498
    %v799 = vpop.f32.mrf.mxu0
    %v800 = vadd.f32 %v687, %v799
    %801 = vmatmul.f32.gmra.mxu0 %v502
    %v802 = vpop.f32.mrf.mxu0
    %v803 = vadd.f32 %v690, %v802
    %804 = vmatmul.f32.gmra.mxu0 %v506
    %v805 = vpop.f32.mrf.mxu0
    %v806 = vadd.f32 %v693, %v805
    %807 = vmatmul.f32.gmra.mxu0 %v510
    %v808 = vpop.f32.mrf.mxu0
    %v809 = vadd.f32 %v696, %v808
    %810 = vmatmul.f32.gmra.mxu0 %v514
    %v811 = vpop.f32.mrf.mxu0
    %v812 = vadd.f32 %v699, %v811
    %813 = vmatmul.f32.gmra.mxu0 %v518
    %v814 = vpop.f32.mrf.mxu0
    %v815 = vadd.f32 %v702, %v814
    %816 = vmatmul.f32.gmra.mxu0 %v522
    %v817 = vpop.f32.mrf.mxu0
    %v818 = vadd.f32 %v705, %v817
    %819 = vmatmul.f32.gmra.mxu0 %v526
    %v820 = vpop.f32.mrf.mxu0
    %v821 = vadd.f32 %v708, %v820
    %822 = vmatmul.f32.gmra.mxu0 %v530
    %v823 = vpop.f32.mrf.mxu0
    %v824 = vadd.f32 %v711, %v823
    %825 = vmatmul.f32.gmra.mxu0 %v534
    %v826 = vpop.f32.mrf.mxu0
    %v827 = vadd.f32 %v714, %v826
    %828 = vmatmul.f32.gmra.mxu0 %v538
    %v829 = vpop.f32.mrf.mxu0
    %v830 = vadd.f32 %v717, %v829
    %831 = vmatmul.f32.gmra.mxu0 %v542
    %v832 = vpop.f32.mrf.mxu0
    %v833 = vadd.f32 %v720, %v832
    %834 = vdwg.mxu0
    %835 = vmatpush.msra.mxu0 %v592
    %836 = vmatpush.msra.mxu0 %v591
    %837 = vmatpush.msra.mxu0 %v590
    %838 = vmatpush.msra.mxu0 %v589
    %839 = vmatpush.msra.mxu0 %v588
    %840 = vmatpush.msra.mxu0 %v587
    %841 = vmatpush.msra.mxu0 %v586
    %842 = vmatpush.msra.mxu0 %v585
    %843 = vmatpush.msra.mxu0 %v584
    %844 = vmatpush.msra.mxu0 %v583
    %845 = vmatpush.msra.mxu0 %v582
    %846 = vmatpush.msra.mxu0 %v581
    %847 = vmatpush.msra.mxu0 %v580
    %848 = vmatpush.msra.mxu0 %v579
    %849 = vmatpush.msra.mxu0 %v578
    %850 = vmatpush.msra.mxu0 %v577
    %851 = vmatmul.f32.gmra.mxu0 %v419
    %v852 = vpop.f32.mrf.mxu0
    %v853 = vadd.f32 %v740, %v852
    %854 = vmatmul.f32.gmra.mxu0 %v423
    %v855 = vpop.f32.mrf.mxu0
    %v856 = vadd.f32 %v743, %v855
    %857 = vmatmul.f32.gmra.mxu0 %v427
    %v858 = vpop.f32.mrf.mxu0
    %v859 = vadd.f32 %v746, %v858
    %860 = vmatmul.f32.gmra.mxu0 %v431
    %v861 = vpop.f32.mrf.mxu0
    %v862 = vadd.f32 %v749, %v861
    %863 = vmatmul.f32.gmra.mxu0 %v435
    %v864 = vpop.f32.mrf.mxu0
    %v865 = vadd.f32 %v752, %v864
    %866 = vmatmul.f32.gmra.mxu0 %v439
    %v867 = vpop.f32.mrf.mxu0
    %v868 = vadd.f32 %v755, %v867
    %869 = vmatmul.f32.gmra.mxu0 %v443
    %v870 = vpop.f32.mrf.mxu0
    %v871 = vadd.f32 %v758, %v870
    %872 = vmatmul.f32.gmra.mxu0 %v447
    %v873 = vpop.f32.mrf.mxu0
    %v874 = vadd.f32 %v761, %v873
    %875 = vmatmul.f32.gmra.mxu0 %v451
    %v876 = vpop.f32.mrf.mxu0
    %v877 = vadd.f32 %v764, %v876
    %878 = vmatmul.f32.gmra.mxu0 %v455
    %v879 = vpop.f32.mrf.mxu0
    %v880 = vadd.f32 %v767, %v879
    %881 = vmatmul.f32.gmra.mxu0 %v459
    %v882 = vpop.f32.mrf.mxu0
    %v883 = vadd.f32 %v770, %v882
    %884 = vmatmul.f32.gmra.mxu0 %v463
    %v885 = vpop.f32.mrf.mxu0
    %v886 = vadd.f32 %v773, %v885
    %887 = vmatmul.f32.gmra.mxu0 %v467
    %v888 = vpop.f32.mrf.mxu0
    %v889 = vadd.f32 %v776, %v888
    %890 = vmatmul.f32.gmra.mxu0 %v471
    %v891 = vpop.f32.mrf.mxu0
    %v892 = vadd.f32 %v779, %v891
    %893 = vmatmul.f32.gmra.mxu0 %v475
    %v894 = vpop.f32.mrf.mxu0
    %v895 = vadd.f32 %v782, %v894
    %896 = vmatmul.f32.gmra.mxu0 %v479
    %v897 = vpop.f32.mrf.mxu0
    %v898 = vadd.f32 %v785, %v897
    %899 = vmatmul.f32.gmra.mxu0 %v483
    %v900 = vpop.f32.mrf.mxu0
    %v901 = vadd.f32 %v788, %v900
    %902 = vmatmul.f32.gmra.mxu0 %v487
    %v903 = vpop.f32.mrf.mxu0
    %v904 = vadd.f32 %v791, %v903
    %905 = vmatmul.f32.gmra.mxu0 %v491
    %v906 = vpop.f32.mrf.mxu0
    %v907 = vadd.f32 %v794, %v906
    %908 = vmatmul.f32.gmra.mxu0 %v495
    %v909 = vpop.f32.mrf.mxu0
    %v910 = vadd.f32 %v797, %v909
    %911 = vmatmul.f32.gmra.mxu0 %v499
    %v912 = vpop.f32.mrf.mxu0
    %v913 = vadd.f32 %v800, %v912
    %914 = vmatmul.f32.gmra.mxu0 %v503
    %v915 = vpop.f32.mrf.mxu0
    %v916 = vadd.f32 %v803, %v915
    %917 = vmatmul.f32.gmra.mxu0 %v507
    %v918 = vpop.f32.mrf.mxu0
    %v919 = vadd.f32 %v806, %v918
    %920 = vmatmul.f32.gmra.mxu0 %v511
    %v921 = vpop.f32.mrf.mxu0
    %v922 = vadd.f32 %v809, %v921
    %923 = vmatmul.f32.gmra.mxu0 %v515
    %v924 = vpop.f32.mrf.mxu0
    %v925 = vadd.f32 %v812, %v924
    %926 = vmatmul.f32.gmra.mxu0 %v519
    %v927 = vpop.f32.mrf.mxu0
    %v928 = vadd.f32 %v815, %v927
    %929 = vmatmul.f32.gmra.mxu0 %v523
    %v930 = vpop.f32.mrf.mxu0
    %v931 = vadd.f32 %v818, %v930
    %932 = vmatmul.f32.gmra.mxu0 %v527
    %v933 = vpop.f32.mrf.mxu0
    %v934 = vadd.f32 %v821, %v933
    %935 = vmatmul.f32.gmra.mxu0 %v531
    %v936 = vpop.f32.mrf.mxu0
    %v937 = vadd.f32 %v824, %v936
    %938 = vmatmul.f32.gmra.mxu0 %v535
    %v939 = vpop.f32.mrf.mxu0
    %v940 = vadd.f32 %v827, %v939
    %941 = vmatmul.f32.gmra.mxu0 %v539
    %v942 = vpop.f32.mrf.mxu0
    %v943 = vadd.f32 %v830, %v942
    %944 = vmatmul.f32.gmra.mxu0 %v543
    %v945 = vpop.f32.mrf.mxu0
    %v946 = vadd.f32 %v833, %v945
    %947 = vdwg.mxu0
    %948 = vmatpush.msra.mxu0 %v608
    %949 = vmatpush.msra.mxu0 %v607
    %950 = vmatpush.msra.mxu0 %v606
    %951 = vmatpush.msra.mxu0 %v605
    %952 = vmatpush.msra.mxu0 %v604
    %953 = vmatpush.msra.mxu0 %v603
    %954 = vmatpush.msra.mxu0 %v602
    %955 = vmatpush.msra.mxu0 %v601
    %956 = vmatpush.msra.mxu0 %v600
    %957 = vmatpush.msra.mxu0 %v599
    %958 = vmatpush.msra.mxu0 %v598
    %959 = vmatpush.msra.mxu0 %v597
    %960 = vmatpush.msra.mxu0 %v596
    %961 = vmatpush.msra.mxu0 %v595
    %962 = vmatpush.msra.mxu0 %v594
    %963 = vmatpush.msra.mxu0 %v593
    %964 = vmatmul.f32.gmra.mxu0 %v420
    %v965 = vpop.f32.mrf.mxu0
    %v966 = vadd.f32 %v853, %v965
    %967 = vmatmul.f32.gmra.mxu0 %v424
    %v968 = vpop.f32.mrf.mxu0
    %v969 = vadd.f32 %v856, %v968
    %970 = vmatmul.f32.gmra.mxu0 %v428
    %v971 = vpop.f32.mrf.mxu0
    %v972 = vadd.f32 %v859, %v971
    %973 = vmatmul.f32.gmra.mxu0 %v432
    %v974 = vpop.f32.mrf.mxu0
    %v975 = vadd.f32 %v862, %v974
    %976 = vmatmul.f32.gmra.mxu0 %v436
    %v977 = vpop.f32.mrf.mxu0
    %v978 = vadd.f32 %v865, %v977
    %979 = vmatmul.f32.gmra.mxu0 %v440
    %v980 = vpop.f32.mrf.mxu0
    %v981 = vadd.f32 %v868, %v980
    %982 = vmatmul.f32.gmra.mxu0 %v444
    %v983 = vpop.f32.mrf.mxu0
    %v984 = vadd.f32 %v871, %v983
    %985 = vmatmul.f32.gmra.mxu0 %v448
    %v986 = vpop.f32.mrf.mxu0
    %v987 = vadd.f32 %v874, %v986
    %988 = vmatmul.f32.gmra.mxu0 %v452
    %v989 = vpop.f32.mrf.mxu0
    %v990 = vadd.f32 %v877, %v989
    %991 = vmatmul.f32.gmra.mxu0 %v456
    %v992 = vpop.f32.mrf.mxu0
    %v993 = vadd.f32 %v880, %v992
    %994 = vmatmul.f32.gmra.mxu0 %v460
    %v995 = vpop.f32.mrf.mxu0
    %v996 = vadd.f32 %v883, %v995
    %997 = vmatmul.f32.gmra.mxu0 %v464
    %v998 = vpop.f32.mrf.mxu0
    %v999 = vadd.f32 %v886, %v998
    %1000 = vmatmul.f32.gmra.mxu0 %v468
    %v1001 = vpop.f32.mrf.mxu0
    %v1002 = vadd.f32 %v889, %v1001
    %1003 = vmatmul.f32.gmra.mxu0 %v472
    %v1004 = vpop.f32.mrf.mxu0
    %v1005 = vadd.f32 %v892, %v1004
    %1006 = vmatmul.f32.gmra.mxu0 %v476
    %v1007 = vpop.f32.mrf.mxu0
    %v1008 = vadd.f32 %v895, %v1007
    %1009 = vmatmul.f32.gmra.mxu0 %v480
    %v1010 = vpop.f32.mrf.mxu0
    %v1011 = vadd.f32 %v898, %v1010
    %1012 = vmatmul.f32.gmra.mxu0 %v484
    %v1013 = vpop.f32.mrf.mxu0
    %v1014 = vadd.f32 %v901, %v1013
    %1015 = vmatmul.f32.gmra.mxu0 %v488
    %v1016 = vpop.f32.mrf.mxu0
    %v1017 = vadd.f32 %v904, %v1016
    %1018 = vmatmul.f32.gmra.mxu0 %v492
    %v1019 = vpop.f32.mrf.mxu0
    %v1020 = vadd.f32 %v907, %v1019
    %1021 = vmatmul.f32.gmra.mxu0 %v496
    %v1022 = vpop.f32.mrf.mxu0
    %v1023 = vadd.f32 %v910, %v1022
    %1024 = vmatmul.f32.gmra.mxu0 %v500
    %v1025 = vpop.f32.mrf.mxu0
    %v1026 = vadd.f32 %v913, %v1025
    %1027 = vmatmul.f32.gmra.mxu0 %v504
    %v1028 = vpop.f32.mrf.mxu0
    %v1029 = vadd.f32 %v916, %v1028
    %1030 = vmatmul.f32.gmra.mxu0 %v508
    %v1031 = vpop.f32.mrf.mxu0
    %v1032 = vadd.f32 %v919, %v1031
    %1033 = vmatmul.f32.gmra.mxu0 %v512
    %v1034 = vpop.f32.mrf.mxu0
    %v1035 = vadd.f32 %v922, %v1034
    %1036 = vmatmul.f32.gmra.mxu0 %v516
    %v1037 = vpop.f32.mrf.mxu0
    %v1038 = vadd.f32 %v925, %v1037
    %1039 = vmatmul.f32.gmra.mxu0 %v520
    %v1040 = vpop.f32.mrf.mxu0
    %v1041 = vadd.f32 %v928, %v1040
    %1042 = vmatmul.f32.gmra.mxu0 %v524
    %v1043 = vpop.f32.mrf.mxu0
    %v1044 = vadd.f32 %v931, %v1043
    %1045 = vmatmul.f32.gmra.mxu0 %v528
    %v1046 = vpop.f32.mrf.mxu0
    %v1047 = vadd.f32 %v934, %v1046
    %1048 = vmatmul.f32.gmra.mxu0 %v532
    %v1049 = vpop.f32.mrf.mxu0
    %v1050 = vadd.f32 %v937, %v1049
    %1051 = vmatmul.f32.gmra.mxu0 %v536
    %v1052 = vpop.f32.mrf.mxu0
    %v1053 = vadd.f32 %v940, %v1052
    %1054 = vmatmul.f32.gmra.mxu0 %v540
    %v1055 = vpop.f32.mrf.mxu0
    %v1056 = vadd.f32 %v943, %v1055
    %1057 = vmatmul.f32.gmra.mxu0 %v544
    %v1058 = vpop.f32.mrf.mxu0
    %v1059 = vadd.f32 %v946, %v1058
    %1060 = vdwg.mxu0
    %1061 = vst [vmem:[#allocation5] sm:$0xff] %v966
    %1062 = vst [vmem:[#allocation5 + $0x8] sm:$0xff] %v969
    %1063 = vst [vmem:[#allocation5 + $0x10] sm:$0xff] %v972
    %1064 = vst [vmem:[#allocation5 + $0x18] sm:$0xff] %v975
    %1065 = vst [vmem:[#allocation5 + $0x20] sm:$0xff] %v978
    %1066 = vst [vmem:[#allocation5 + $0x28] sm:$0xff] %v981
    %1067 = vst [vmem:[#allocation5 + $0x30] sm:$0xff] %v984
    %1068 = vst [vmem:[#allocation5 + $0x38] sm:$0xff] %v987
    %1069 = vst [vmem:[#allocation5 + $0x40] sm:$0xff] %v990
    %1070 = vst [vmem:[#allocation5 + $0x48] sm:$0xff] %v993
    %1071 = vst [vmem:[#allocation5 + $0x50] sm:$0xff] %v996
    %1072 = vst [vmem:[#allocation5 + $0x58] sm:$0xff] %v999
    %1073 = vst [vmem:[#allocation5 + $0x60] sm:$0xff] %v1002
    %1074 = vst [vmem:[#allocation5 + $0x68] sm:$0xff] %v1005
    %1075 = vst [vmem:[#allocation5 + $0x70] sm:$0xff] %v1008
    %1076 = vst [vmem:[#allocation5 + $0x78] sm:$0xff] %v1011
    %1077 = vst [vmem:[#allocation5 + $0x80] sm:$0xff] %v1014
    %1078 = vst [vmem:[#allocation5 + $0x88] sm:$0xff] %v1017
    %1079 = vst [vmem:[#allocation5 + $0x90] sm:$0xff] %v1020
    %1080 = vst [vmem:[#allocation5 + $0x98] sm:$0xff] %v1023
    %1081 = vst [vmem:[#allocation5 + $0xa0] sm:$0xff] %v1026
    %1082 = vst [vmem:[#allocation5 + $0xa8] sm:$0xff] %v1029
    %1083 = vst [vmem:[#allocation5 + $0xb0] sm:$0xff] %v1032
    %1084 = vst [vmem:[#allocation5 + $0xb8] sm:$0xff] %v1035
    %1085 = vst [vmem:[#allocation5 + $0xc0] sm:$0xff] %v1038
    %1086 = vst [vmem:[#allocation5 + $0xc8] sm:$0xff] %v1041
    %1087 = vst [vmem:[#allocation5 + $0xd0] sm:$0xff] %v1044
    %1088 = vst [vmem:[#allocation5 + $0xd8] sm:$0xff] %v1047
    %1089 = vst [vmem:[#allocation5 + $0xe0] sm:$0xff] %v1050
    %1090 = vst [vmem:[#allocation5 + $0xe8] sm:$0xff] %v1053
    %1091 = vst [vmem:[#allocation5 + $0xf0] sm:$0xff] %v1056
    %1092 = vst [vmem:[#allocation5 + $0xf8] sm:$0xff] %v1059
    // Predicated region
    $region14: #{tpu_custom_call.1} parent=1 // pred_check
      _
    $region15: #{tpu_custom_call.1} parent=1 // pred_check_branch
      %1094 = sbr.rel (0) target = $region17
    $region16: #{tpu_custom_call.1} parent=1 // pred_region
      %1096 = vsyncadd [#allocation4], 0
      %s1097 = sshll.u32 [#allocation5], 4
      %s1098 = int_to_ptr.vmem [resolvable:$true] %s1097
      %s1099 = sshll.u32 %s2, 4
      %s1100 = int_to_ptr.hbm [resolvable:$true] %s1099
      %1105 = dma.vmem_to_hbm [thread:$0]  %s1098, 4096, %s1100, [#allocation4], 128, 128, 8
    $region17: #{tpu_custom_call.1} parent=1 // pred_fallthru
      _
    // Predicated region
    $region18: #{tpu_custom_call.1} parent=1 // pred_check
      _
    $region19: #{tpu_custom_call.1} parent=1 // pred_check_branch
      %1107 = sbr.rel (0) target = $region21
    $region20: #{tpu_custom_call.1} parent=1 // pred_region
      %1109 = dma.done [#allocation4], 4096
    $region21: #{tpu_custom_call.1} parent=1 // pred_fallthru
      _
    %1110 = vsyncpa [#allocation3], 1
    %1111 = vsyncpa [#allocation4], 1

</llo_original>
